<compile_context>
chip_gen: v6e
topology: v6e:2x2x1
jax: 0.10.0
libtpu: 0.0.40
codegen_flags: <defaults>
</compile_context>

<pallas_src>
import functools

import numpy as np
import jax
import jax.numpy as jnp
from jax.experimental import pallas as pl
from jax.experimental.pallas import tpu as pltpu

F_PAD = 128          # lane-padded feature width shared by every layer
BIAS_LANE = 127      # activation lane reserved for the constant 1.0 (bias trick)
SMALL_BATCH = 256    # below this, a single grid step minimizes fixed overhead


def mlp_kernel(x_ref, params_ref, o_ref, *, n_layers):
    """Fused DQN forward on one batch tile.

    x_ref:      (TILE_B, 128) f32   lane-padded activations, lane 127 == 1.0
    params_ref: (n_layers, 128, 128) bf16  per layer: rows [0:128) = W (in,out)
                with row 127 = bias (and [127,127] = 1.0 to re-emit the constant)
    o_ref:      (TILE_B, 128) f32   lane-padded output (caller slices)
    """
    h = x_ref[...]
    for i in range(n_layers):
        w = params_ref[i]  # static index into the VMEM-resident slab (no copy)
        # bf16 x bf16 MXU matmul with explicit f32 accumulation; bias rides in
        # via the constant-1 lane, so no separate broadcast + add is needed.
        h = jnp.dot(h.astype(jnp.bfloat16), w, preferred_element_type=jnp.float32)
        if i < n_layers - 1:  # ReLU on all but the output layer
            h = jnp.maximum(h, 0.0)
    o_ref[...] = h.astype(o_ref.dtype)


def pack_params(params, dtype=jnp.bfloat16):
    """Pack [(W:(in,out), b:(1,out)), ...] into one (n_layers, 128, 128) slab.

    Host-side (numpy) packing, intended to run ONCE at parameter-init time:
    a single device transfer instead of 2*n_layers dynamic-update-slices per
    forward call.  Zero padding keeps the math exact; the bias lives in row
    BIAS_LANE and is applied by the matmul through the constant-1 lane.
    """
    n_layers = len(params)
    slab = np.zeros((n_layers, F_PAD, F_PAD), np.float32)
    for i, (w, b) in enumerate(params):
        fi, fo = int(w.shape[0]), int(w.shape[1])
        # Fail loudly if dims outgrow the single-tile slab layout.
        assert fi <= BIAS_LANE and fo <= BIAS_LANE, (
            "pack_params: feature dims must be <= 127 for the fused slab layout")
        slab[i, :fi, :fo] = np.asarray(w, np.float32)
        slab[i, BIAS_LANE, :fo] = np.asarray(b, np.float32).reshape(-1)
        slab[i, BIAS_LANE, BIAS_LANE] = 1.0  # re-emit the constant-1 lane
    return jnp.asarray(slab, dtype)


def _round_up(x, m):
    return (x + m - 1) // m * m


@functools.partial(jax.jit, static_argnames=("out_dim", "tile_cap", "num_shards"))
def dqn_forward(x, slab, *, out_dim, tile_cap=2048, num_shards=2):
    """x: (batch, in_dim) f32.  slab: pre-packed (n_layers, 128, 128) params."""
    n_layers = slab.shape[0]
    batch, in_dim = x.shape
    assert in_dim <= BIAS_LANE

    # Batch tiling policy:
    #   - small batches: one grid step (lowest per-step overhead, v5e/v6e).
    #   - large batches: >= num_shards fat tiles so v7x's 2 TCs both get work,
    #     capped at tile_cap rows (double-buffered f32 in+out tiles at 2048
    #     rows are ~4 MiB -> safely under even v5e's 16 MiB scoped-VMEM default).
    pb = _round_up(batch, 8)
    if pb <= SMALL_BATCH:
        tb = pb
    else:
        tb = min(tile_cap, _round_up(-(-pb // num_shards), 8))
    pb = _round_up(pb, tb)
    grid = pb // tb

    # Padded activations: real data in lanes [0:in_dim), 1.0 in the bias lane.
    # Under jit this pad and the final slice fuse with the surrounding graph.
    x_pad = jnp.zeros((pb, F_PAD), jnp.float32)
    x_pad = x_pad.at[:batch, :in_dim].set(x.astype(jnp.float32))
    x_pad = x_pad.at[:batch, BIAS_LANE].set(1.0)

    kernel = functools.partial(mlp_kernel, n_layers=n_layers)
    out_pad = pl.pallas_call(
        kernel,
        out_shape=jax.ShapeDtypeStruct((pb, F_PAD), jnp.float32),
        grid_spec=pltpu.PrefetchScalarGridSpec(
            num_scalar_prefetch=0,
            grid=(grid,),
            in_specs=[
                # Activations: one batch tile per grid step (software-pipelined).
                pl.BlockSpec((tb, F_PAD), lambda i: (i, 0)),
                # Param slab: constant index -> DMA'd once, VMEM-resident.
                # (pl.Buffered(1) would drop the unused 2nd buffer; at ~130 KB
                #  bf16 it is irrelevant, so we keep the default for safety.)
                pl.BlockSpec((n_layers, F_PAD, F_PAD), lambda i: (0, 0, 0)),
            ],
            out_specs=pl.BlockSpec((tb, F_PAD), lambda i: (i, 0)),
        ),
        compiler_params=pltpu.CompilerParams(
            dimension_semantics=("parallel",),  # batch tiles shard across v7x's 2 TCs
        ),
    )(x_pad, slab)
    return out_pad[:batch, :out_dim]


def init_dqn_params(key, inputs, outputs, num_hidden, hidden_size):
    """Deterministic init mimicking nn.Linear's uniform(-1/sqrt(fan_in), ...)."""
    dims = [inputs] + [hidden_size] * num_hidden + [outputs]
    params = []
    for i in range(len(dims) - 1):
        fan_in, fan_out = dims[i], dims[i + 1]
        key, kw, kb = jax.random.split(key, 3)
        bound = 1.0 / float(np.sqrt(fan_in))
        # W stored as (in, out) == PyTorch weight.T
        w = jax.random.uniform(kw, (fan_in, fan_out), jnp.float32, -bound, bound)
        b = jax.random.uniform(kb, (1, fan_out), jnp.float32, -bound, bound)
        params.append((w, b))
    return params


def dqn_reference_f32(x, params):
    """Exact f32 reference of the original PyTorch module's forward."""
    h = x
    for i, (w, b) in enumerate(params):
        h = h @ w + b.reshape(1, -1)
        if i < len(params) - 1:
            h = jnp.maximum(h, 0.0)
    return h


def dqn_reference_bf16(x, params):
    """Mirror of the kernel numerics: bf16 operands per matmul, f32 accumulation."""
    h = x
    for i, (w, b) in enumerate(params):
        hb = h.astype(jnp.bfloat16).astype(jnp.float32)
        wb = w.astype(jnp.bfloat16).astype(jnp.float32)
        bb = b.astype(jnp.bfloat16).astype(jnp.float32).reshape(1, -1)
        h = hb @ wb + bb
        if i < len(params) - 1:
            h = jnp.maximum(h, 0.0)
    return h


if __name__ == "__main__":
    # DQN(inputs=4, outputs=2, num_hidden=3, hidden_size=32)
    inputs, outputs, num_hidden, hidden_size = 4, 2, 3, 32
    batch = 8

    key = jax.random.PRNGKey(0)
    key, kx = jax.random.split(key)
    x = jax.random.normal(kx, (batch, inputs), jnp.float32)
    params = init_dqn_params(key, inputs, outputs, num_hidden, hidden_size)

    # Pack the weight slab ONCE (init-time), not per forward call.
    slab = pack_params(params)

    # Small inference batch: single grid step.
    out = jax.block_until_ready(dqn_forward(x, slab, out_dim=outputs))
    assert out.shape == (batch, outputs)
    assert jnp.allclose(out, dqn_reference_bf16(x, params), atol=2e-4, rtol=2e-4), \
        "mismatch vs bf16-mirror reference"
    assert jnp.allclose(out, dqn_reference_f32(x, params), atol=5e-2, rtol=5e-2), \
        "mismatch vs f32 reference (beyond bf16 tolerance)"

    # Training-size batch: exercises the multi-tile (>=2 grid steps) path.
    key, kx2 = jax.random.split(key)
    x_big = jax.random.normal(kx2, (512, inputs), jnp.float32)
    out_big = jax.block_until_ready(dqn_forward(x_big, slab, out_dim=outputs))
    assert out_big.shape == (512, outputs)
    assert jnp.allclose(out_big, dqn_reference_bf16(x_big, params), atol=2e-4, rtol=2e-4), \
        "mismatch (batched) vs bf16-mirror reference"
    assert jnp.allclose(out_big, dqn_reference_f32(x_big, params), atol=5e-2, rtol=5e-2), \
        "mismatch (batched) vs f32 reference"

    print("KERNEL_OK")
</pallas_src>

<mosaic_0001>
module attributes {stable_mosaic.version = 11 : i64} {
  func.func @mlp_kernel(%arg0: i32, %arg1: memref<8x128xf32, #tpu.memory_space<vmem>>, %arg2: memref<4x128x128xbf16, #tpu.memory_space<vmem>>, %arg3: memref<8x128xf32, #tpu.memory_space<vmem>>) attributes {dimension_semantics = [#tpu.dimension_semantics<parallel>], iteration_bounds = array<i64: 1>, scalar_prefetch = 0 : i64, scratch_operands = 0 : i64, tpu.core_type = #tpu.core_type<tc>, window_params = [{transform_indices = @transform_0, window_bounds = array<i64: 8, 128>}, {pipeline_mode = #tpu.pipeline_mode<synchronous>, transform_indices = @transform_1, window_bounds = array<i64: 4, 128, 128>}, {transform_indices = @transform_2, window_bounds = array<i64: 8, 128>}]} {
    %c0 = arith.constant 0 : index
    %c0_0 = arith.constant 0 : index
    %0 = vector.load %arg1[%c0, %c0_0] : memref<8x128xf32, #tpu.memory_space<vmem>>, vector<8x128xf32>
    %c0_1 = arith.constant 0 : index
    %c0_2 = arith.constant 0 : index
    %c0_3 = arith.constant 0 : index
    %1 = vector.load %arg2[%c0_1, %c0_2, %c0_3] : memref<4x128x128xbf16, #tpu.memory_space<vmem>>, vector<1x128x128xbf16>
    %2 = vector.shape_cast %1 : vector<1x128x128xbf16> to vector<128x128xbf16>
    %3 = arith.truncf %0 : vector<8x128xf32> to vector<8x128xbf16>
    %cst = arith.constant dense<0.000000e+00> : vector<8x128xf32>
    %4 = tpu.matmul %3, %2, %cst {dimension_numbers = #tpu.dot_dimension_numbers<[1], [0], [0], [1], [0, 0, 1, 1], [], []>} : vector<8x128xbf16>, vector<128x128xbf16>, vector<8x128xf32> -> vector<8x128xf32>
    %cst_4 = arith.constant 0.000000e+00 : f32
    %5 = vector.broadcast %cst_4 : f32 to vector<8x128xf32>
    %6 = arith.maximumf %4, %5 : vector<8x128xf32>
    %c1 = arith.constant 1 : index
    %c0_5 = arith.constant 0 : index
    %c0_6 = arith.constant 0 : index
    %7 = vector.load %arg2[%c1, %c0_5, %c0_6] : memref<4x128x128xbf16, #tpu.memory_space<vmem>>, vector<1x128x128xbf16>
    %8 = vector.shape_cast %7 : vector<1x128x128xbf16> to vector<128x128xbf16>
    %9 = arith.truncf %6 : vector<8x128xf32> to vector<8x128xbf16>
    %cst_7 = arith.constant dense<0.000000e+00> : vector<8x128xf32>
    %10 = tpu.matmul %9, %8, %cst_7 {dimension_numbers = #tpu.dot_dimension_numbers<[1], [0], [0], [1], [0, 0, 1, 1], [], []>} : vector<8x128xbf16>, vector<128x128xbf16>, vector<8x128xf32> -> vector<8x128xf32>
    %cst_8 = arith.constant 0.000000e+00 : f32
    %11 = vector.broadcast %cst_8 : f32 to vector<8x128xf32>
    %12 = arith.maximumf %10, %11 : vector<8x128xf32>
    %c2 = arith.constant 2 : index
    %c0_9 = arith.constant 0 : index
    %c0_10 = arith.constant 0 : index
    %13 = vector.load %arg2[%c2, %c0_9, %c0_10] : memref<4x128x128xbf16, #tpu.memory_space<vmem>>, vector<1x128x128xbf16>
    %14 = vector.shape_cast %13 : vector<1x128x128xbf16> to vector<128x128xbf16>
    %15 = arith.truncf %12 : vector<8x128xf32> to vector<8x128xbf16>
    %cst_11 = arith.constant dense<0.000000e+00> : vector<8x128xf32>
    %16 = tpu.matmul %15, %14, %cst_11 {dimension_numbers = #tpu.dot_dimension_numbers<[1], [0], [0], [1], [0, 0, 1, 1], [], []>} : vector<8x128xbf16>, vector<128x128xbf16>, vector<8x128xf32> -> vector<8x128xf32>
    %cst_12 = arith.constant 0.000000e+00 : f32
    %17 = vector.broadcast %cst_12 : f32 to vector<8x128xf32>
    %18 = arith.maximumf %16, %17 : vector<8x128xf32>
    %c3 = arith.constant 3 : index
    %c0_13 = arith.constant 0 : index
    %c0_14 = arith.constant 0 : index
    %19 = vector.load %arg2[%c3, %c0_13, %c0_14] : memref<4x128x128xbf16, #tpu.memory_space<vmem>>, vector<1x128x128xbf16>
    %20 = vector.shape_cast %19 : vector<1x128x128xbf16> to vector<128x128xbf16>
    %21 = arith.truncf %18 : vector<8x128xf32> to vector<8x128xbf16>
    %cst_15 = arith.constant dense<0.000000e+00> : vector<8x128xf32>
    %22 = tpu.matmul %21, %20, %cst_15 {dimension_numbers = #tpu.dot_dimension_numbers<[1], [0], [0], [1], [0, 0, 1, 1], [], []>} : vector<8x128xbf16>, vector<128x128xbf16>, vector<8x128xf32> -> vector<8x128xf32>
    %c0_16 = arith.constant 0 : index
    %c0_17 = arith.constant 0 : index
    %23 = vector.load %arg3[%c0_16, %c0_17] : memref<8x128xf32, #tpu.memory_space<vmem>>, vector<8x128xf32>
    tpu.vector_store %arg3[%c0_16, %c0_17], %22 {strides = array<i32>} : memref<8x128xf32, #tpu.memory_space<vmem>>, vector<8x128xf32>,
    return
  }
  func.func @transform_0(%arg0: i32) -> (i32, i32) {
    %c0_i32 = arith.constant 0 : i32
    %c0_i32_0 = arith.constant 0 : i32
    return %arg0, %c0_i32 : i32, i32
  }
  func.func @transform_1(%arg0: i32) -> (i32, i32, i32) {
    %c0_i32 = arith.constant 0 : i32
    %c0_i32_0 = arith.constant 0 : i32
    %c0_i32_1 = arith.constant 0 : i32
    %c0_i32_2 = arith.constant 0 : i32
    return %c0_i32, %c0_i32_0, %c0_i32_1 : i32, i32, i32
  }
  func.func @transform_2(%arg0: i32) -> (i32, i32) {
    %c0_i32 = arith.constant 0 : i32
    %c0_i32_0 = arith.constant 0 : i32
    return %arg0, %c0_i32 : i32, i32
  }
}

</mosaic_0001>

<llo_original>
// kernel: dqn_forward.1
$region0: #{dqn_forward.1}
  #allocation0 [shape = 'u32[]', space=smem, size = 0x4, offset = 0x4, fixed_abs, tag = 'smem constant byte address 0x4 - core index']
  #allocation1 [shape = 'u32[144,128]{1,0:T(1,128)}', space=vmem, size = 0x12000, scoped, tag = 'internal scratch']
  %s0 = inlined_call_operand.vmem [shape: f32[8,128], index: 0, kind: input, shape index: {}]
  %s1 = inlined_call_operand.hbm [shape: bf16[4,128,128], index: 1, kind: input, shape index: {}]
  %s2 = inlined_call_operand.vmem [shape: f32[8,128], index: 2, kind: output, shape index: {}]
  %s3 = sld [smem:[#allocation0]]
  $region22: #{dqn_forward.1} parent=0
    _
  %s5 = ssub.s32 1, %s3
  %s6 = scalar_select 0, %s5, %s3
  $region1: #{dqn_forward.1} parent=0
    #allocation2 [shape = 'u8[131072]{0}', space=vmem, size = 0x20000, scoped, tag = 'input window, operand 1, single buffered']
    #allocation3 [shape = 's32[1]{0}', space=sflag, size = 0x4, scoped, tag = 'scoped memory for dqn_forward.1']
    %7 = vsyncpa [#allocation3], 0
    // Predicated region
    $region2: #{dqn_forward.1} parent=1 // pred_check
      _
    $region3: #{dqn_forward.1} parent=1 // pred_check_branch
      %9 = sbr.rel (0) target = $region5
    $region4: #{dqn_forward.1} parent=1 // pred_region
      _
    $region5: #{dqn_forward.1} parent=1 // pred_fallthru
      _
    // Predicated region
    $region6: #{dqn_forward.1} parent=1 // pred_check
      _
    $region7: #{dqn_forward.1} parent=1 // pred_check_branch
      %11 = sbr.rel (0) target = $region9
    $region8: #{dqn_forward.1} parent=1 // pred_region
      %s13 = ssub.s32 4096, 4096
      %14 = vsyncadd [#allocation3], %s13
      %s15 = sshll.u32 [#allocation2], 4
      %s16 = int_to_ptr.vmem [resolvable:$true] %s15
      %21 = dma.hbm_to_vmem [thread:$0]  %s1, 4096, %s16, [#allocation3], 64, 64, 4
    $region9: #{dqn_forward.1} parent=1 // pred_fallthru
      _
    // Predicated region
    $region10: #{dqn_forward.1} parent=1 // pred_check
      _
    $region11: #{dqn_forward.1} parent=1 // pred_check_branch
      %23 = sbr.rel (0) target = $region13
    $region12: #{dqn_forward.1} parent=1 // pred_region
      %24 = dma.done [#allocation3], 4096
    $region13: #{dqn_forward.1} parent=1 // pred_fallthru
      _
    %v26 = vld [vmem:[%s0] sm:$0xff]
    %v27 = vld [vmem:[#allocation2] sm:$0xf]
    %v28 = vld [vmem:[#allocation2 + $0x4] sm:$0xf]
    %v29 = vld [vmem:[#allocation2 + $0x8] sm:$0xf]
    %v30 = vld [vmem:[#allocation2 + $0xc] sm:$0xf]
    %v31 = vld [vmem:[#allocation2 + $0x10] sm:$0xf]
    %v32 = vld [vmem:[#allocation2 + $0x14] sm:$0xf]
    %v33 = vld [vmem:[#allocation2 + $0x18] sm:$0xf]
    %v34 = vld [vmem:[#allocation2 + $0x1c] sm:$0xf]
    %v35 = vld [vmem:[#allocation2 + $0x20] sm:$0xf]
    %v36 = vld [vmem:[#allocation2 + $0x24] sm:$0xf]
    %v37 = vld [vmem:[#allocation2 + $0x28] sm:$0xf]
    %v38 = vld [vmem:[#allocation2 + $0x2c] sm:$0xf]
    %v39 = vld [vmem:[#allocation2 + $0x30] sm:$0xf]
    %v40 = vld [vmem:[#allocation2 + $0x34] sm:$0xf]
    %v41 = vld [vmem:[#allocation2 + $0x38] sm:$0xf]
    %v42 = vld [vmem:[#allocation2 + $0x3c] sm:$0xf]
    %v43 = vpack.c.bf16 %v26, %v26
    %v60 = vunpack.c.l.b16 %v27
    %v61 = vunpack.c.l.b16 %v28
    %v62 = vunpack.c.l.b16 %v29
    %v63 = vunpack.c.l.b16 %v30
    %v64 = vunpack.c.l.b16 %v31
    %v65 = vunpack.c.l.b16 %v32
    %v66 = vunpack.c.l.b16 %v33
    %v67 = vunpack.c.l.b16 %v34
    %v68 = vunpack.c.l.b16 %v35
    %v69 = vunpack.c.l.b16 %v36
    %v70 = vunpack.c.l.b16 %v37
    %v71 = vunpack.c.l.b16 %v38
    %v72 = vunpack.c.l.b16 %v39
    %v73 = vunpack.c.l.b16 %v40
    %v74 = vunpack.c.l.b16 %v41
    %v75 = vunpack.c.l.b16 %v42
    %v76 = vpack.c.b16 %v61, %v60
    %v77 = vpack.c.b16 %v63, %v62
    %v78 = vpack.c.b16 %v65, %v64
    %v79 = vpack.c.b16 %v67, %v66
    %v80 = vpack.c.b16 %v69, %v68
    %v81 = vpack.c.b16 %v71, %v70
    %v82 = vpack.c.b16 %v73, %v72
    %v83 = vpack.c.b16 %v75, %v74
    %92 = vmatprep.subr.bf16.mxu0 0
    %93 = vmatpush1.bf16.msra.mxu0 %v83
    %94 = vmatprep.subr.bf16.mxu0 0
    %95 = vmatpush1.bf16.msra.mxu0 %v82
    %96 = vmatprep.subr.bf16.mxu0 0
    %97 = vmatpush1.bf16.msra.mxu0 %v81
    %98 = vmatprep.subr.bf16.mxu0 0
    %99 = vmatpush1.bf16.msra.mxu0 %v80
    %100 = vmatprep.subr.bf16.mxu0 0
    %101 = vmatpush1.bf16.msra.mxu0 %v79
    %102 = vmatprep.subr.bf16.mxu0 0
    %103 = vmatpush1.bf16.msra.mxu0 %v78
    %104 = vmatprep.subr.bf16.mxu0 0
    %105 = vmatpush1.bf16.msra.mxu0 %v77
    %106 = vmatprep.subr.bf16.mxu0 0
    %107 = vmatpush1.bf16.msra.mxu0 %v76
    %108 = vmatprep.subr.bf16.mxu0 0
    %109 = vmatpush2.bf16.msra.mxu0 0
    %110 = vmatprep.subr.bf16.mxu0 0
    %111 = vmatpush2.bf16.msra.mxu0 0
    %112 = vmatprep.subr.bf16.mxu0 0
    %113 = vmatpush2.bf16.msra.mxu0 0
    %114 = vmatprep.subr.bf16.mxu0 0
    %115 = vmatpush2.bf16.msra.mxu0 0
    %116 = vmatprep.subr.bf16.mxu0 0
    %117 = vmatpush2.bf16.msra.mxu0 0
    %118 = vmatprep.subr.bf16.mxu0 0
    %119 = vmatpush2.bf16.msra.mxu0 0
    %120 = vmatprep.subr.bf16.mxu0 0
    %121 = vmatpush2.bf16.msra.mxu0 0
    %122 = vmatprep.subr.bf16.mxu0 0
    %123 = vmatpush2.bf16.msra.mxu0 0
    %124 = vmatprep.mubr.bf16.mxu0 0
    %125 = vmatmul.mubr.bf16.gmra.mxu0 %v43
    %v126 = vpop.f32.mrf.mxu0
    %v127 = vadd.f32 0.0, %v126
    %v128 = vpop.f32.mrf.mxu0
    %v129 = vpop.f32.mrf.mxu0
    %v130 = vpop.f32.mrf.mxu0
    %131 = vdwg.mxu0
    %v132 = vmax.f32 %v127, 0.0
    %s133 = scalar_lea.vmem [#allocation2], 64
    %v134 = vld [vmem:[%s133] sm:$0xf]
    %v135 = vld [vmem:[%s133 + $0x4] sm:$0xf]
    %v136 = vld [vmem:[%s133 + $0x8] sm:$0xf]
    %v137 = vld [vmem:[%s133 + $0xc] sm:$0xf]
    %v138 = vld [vmem:[%s133 + $0x10] sm:$0xf]
    %v139 = vld [vmem:[%s133 + $0x14] sm:$0xf]
    %v140 = vld [vmem:[%s133 + $0x18] sm:$0xf]
    %v141 = vld [vmem:[%s133 + $0x1c] sm:$0xf]
    %v142 = vld [vmem:[%s133 + $0x20] sm:$0xf]
    %v143 = vld [vmem:[%s133 + $0x24] sm:$0xf]
    %v144 = vld [vmem:[%s133 + $0x28] sm:$0xf]
    %v145 = vld [vmem:[%s133 + $0x2c] sm:$0xf]
    %v146 = vld [vmem:[%s133 + $0x30] sm:$0xf]
    %v147 = vld [vmem:[%s133 + $0x34] sm:$0xf]
    %v148 = vld [vmem:[%s133 + $0x38] sm:$0xf]
    %v149 = vld [vmem:[%s133 + $0x3c] sm:$0xf]
    %v150 = vpack.c.bf16 %v132, %v132
    %v167 = vunpack.c.l.b16 %v134
    %v168 = vunpack.c.l.b16 %v135
    %v169 = vunpack.c.l.b16 %v136
    %v170 = vunpack.c.l.b16 %v137
    %v171 = vunpack.c.l.b16 %v138
    %v172 = vunpack.c.l.b16 %v139
    %v173 = vunpack.c.l.b16 %v140
    %v174 = vunpack.c.l.b16 %v141
    %v175 = vunpack.c.l.b16 %v142
    %v176 = vunpack.c.l.b16 %v143
    %v177 = vunpack.c.l.b16 %v144
    %v178 = vunpack.c.l.b16 %v145
    %v179 = vunpack.c.l.b16 %v146
    %v180 = vunpack.c.l.b16 %v147
    %v181 = vunpack.c.l.b16 %v148
    %v182 = vunpack.c.l.b16 %v149
    %v183 = vpack.c.b16 %v168, %v167
    %v184 = vpack.c.b16 %v170, %v169
    %v185 = vpack.c.b16 %v172, %v171
    %v186 = vpack.c.b16 %v174, %v173
    %v187 = vpack.c.b16 %v176, %v175
    %v188 = vpack.c.b16 %v178, %v177
    %v189 = vpack.c.b16 %v180, %v179
    %v190 = vpack.c.b16 %v182, %v181
    %199 = vmatprep.subr.bf16.mxu0 0
    %200 = vmatpush1.bf16.msra.mxu0 %v190
    %201 = vmatprep.subr.bf16.mxu0 0
    %202 = vmatpush1.bf16.msra.mxu0 %v189
    %203 = vmatprep.subr.bf16.mxu0 0
    %204 = vmatpush1.bf16.msra.mxu0 %v188
    %205 = vmatprep.subr.bf16.mxu0 0
    %206 = vmatpush1.bf16.msra.mxu0 %v187
    %207 = vmatprep.subr.bf16.mxu0 0
    %208 = vmatpush1.bf16.msra.mxu0 %v186
    %209 = vmatprep.subr.bf16.mxu0 0
    %210 = vmatpush1.bf16.msra.mxu0 %v185
    %211 = vmatprep.subr.bf16.mxu0 0
    %212 = vmatpush1.bf16.msra.mxu0 %v184
    %213 = vmatprep.subr.bf16.mxu0 0
    %214 = vmatpush1.bf16.msra.mxu0 %v183
    %215 = vmatprep.subr.bf16.mxu0 0
    %216 = vmatpush2.bf16.msra.mxu0 0
    %217 = vmatprep.subr.bf16.mxu0 0
    %218 = vmatpush2.bf16.msra.mxu0 0
    %219 = vmatprep.subr.bf16.mxu0 0
    %220 = vmatpush2.bf16.msra.mxu0 0
    %221 = vmatprep.subr.bf16.mxu0 0
    %222 = vmatpush2.bf16.msra.mxu0 0
    %223 = vmatprep.subr.bf16.mxu0 0
    %224 = vmatpush2.bf16.msra.mxu0 0
    %225 = vmatprep.subr.bf16.mxu0 0
    %226 = vmatpush2.bf16.msra.mxu0 0
    %227 = vmatprep.subr.bf16.mxu0 0
    %228 = vmatpush2.bf16.msra.mxu0 0
    %229 = vmatprep.subr.bf16.mxu0 0
    %230 = vmatpush2.bf16.msra.mxu0 0
    %231 = vmatprep.mubr.bf16.mxu0 0
    %232 = vmatmul.mubr.bf16.gmra.mxu0 %v150
    %v233 = vpop.f32.mrf.mxu0
    %v234 = vadd.f32 0.0, %v233
    %v235 = vpop.f32.mrf.mxu0
    %v236 = vpop.f32.mrf.mxu0
    %v237 = vpop.f32.mrf.mxu0
    %238 = vdwg.mxu0
    %v239 = vmax.f32 %v234, 0.0
    %s240 = scalar_lea.vmem [#allocation2], 128
    %v241 = vld [vmem:[%s240] sm:$0xf]
    %v242 = vld [vmem:[%s240 + $0x4] sm:$0xf]
    %v243 = vld [vmem:[%s240 + $0x8] sm:$0xf]
    %v244 = vld [vmem:[%s240 + $0xc] sm:$0xf]
    %v245 = vld [vmem:[%s240 + $0x10] sm:$0xf]
    %v246 = vld [vmem:[%s240 + $0x14] sm:$0xf]
    %v247 = vld [vmem:[%s240 + $0x18] sm:$0xf]
    %v248 = vld [vmem:[%s240 + $0x1c] sm:$0xf]
    %v249 = vld [vmem:[%s240 + $0x20] sm:$0xf]
    %v250 = vld [vmem:[%s240 + $0x24] sm:$0xf]
    %v251 = vld [vmem:[%s240 + $0x28] sm:$0xf]
    %v252 = vld [vmem:[%s240 + $0x2c] sm:$0xf]
    %v253 = vld [vmem:[%s240 + $0x30] sm:$0xf]
    %v254 = vld [vmem:[%s240 + $0x34] sm:$0xf]
    %v255 = vld [vmem:[%s240 + $0x38] sm:$0xf]
    %v256 = vld [vmem:[%s240 + $0x3c] sm:$0xf]
    %v257 = vpack.c.bf16 %v239, %v239
    %v274 = vunpack.c.l.b16 %v241
    %v275 = vunpack.c.l.b16 %v242
    %v276 = vunpack.c.l.b16 %v243
    %v277 = vunpack.c.l.b16 %v244
    %v278 = vunpack.c.l.b16 %v245
    %v279 = vunpack.c.l.b16 %v246
    %v280 = vunpack.c.l.b16 %v247
    %v281 = vunpack.c.l.b16 %v248
    %v282 = vunpack.c.l.b16 %v249
    %v283 = vunpack.c.l.b16 %v250
    %v284 = vunpack.c.l.b16 %v251
    %v285 = vunpack.c.l.b16 %v252
    %v286 = vunpack.c.l.b16 %v253
    %v287 = vunpack.c.l.b16 %v254
    %v288 = vunpack.c.l.b16 %v255
    %v289 = vunpack.c.l.b16 %v256
    %v290 = vpack.c.b16 %v275, %v274
    %v291 = vpack.c.b16 %v277, %v276
    %v292 = vpack.c.b16 %v279, %v278
    %v293 = vpack.c.b16 %v281, %v280
    %v294 = vpack.c.b16 %v283, %v282
    %v295 = vpack.c.b16 %v285, %v284
    %v296 = vpack.c.b16 %v287, %v286
    %v297 = vpack.c.b16 %v289, %v288
    %306 = vmatprep.subr.bf16.mxu0 0
    %307 = vmatpush1.bf16.msra.mxu0 %v297
    %308 = vmatprep.subr.bf16.mxu0 0
    %309 = vmatpush1.bf16.msra.mxu0 %v296
    %310 = vmatprep.subr.bf16.mxu0 0
    %311 = vmatpush1.bf16.msra.mxu0 %v295
    %312 = vmatprep.subr.bf16.mxu0 0
    %313 = vmatpush1.bf16.msra.mxu0 %v294
    %314 = vmatprep.subr.bf16.mxu0 0
    %315 = vmatpush1.bf16.msra.mxu0 %v293
    %316 = vmatprep.subr.bf16.mxu0 0
    %317 = vmatpush1.bf16.msra.mxu0 %v292
    %318 = vmatprep.subr.bf16.mxu0 0
    %319 = vmatpush1.bf16.msra.mxu0 %v291
    %320 = vmatprep.subr.bf16.mxu0 0
    %321 = vmatpush1.bf16.msra.mxu0 %v290
    %322 = vmatprep.subr.bf16.mxu0 0
    %323 = vmatpush2.bf16.msra.mxu0 0
    %324 = vmatprep.subr.bf16.mxu0 0
    %325 = vmatpush2.bf16.msra.mxu0 0
    %326 = vmatprep.subr.bf16.mxu0 0
    %327 = vmatpush2.bf16.msra.mxu0 0
    %328 = vmatprep.subr.bf16.mxu0 0
    %329 = vmatpush2.bf16.msra.mxu0 0
    %330 = vmatprep.subr.bf16.mxu0 0
    %331 = vmatpush2.bf16.msra.mxu0 0
    %332 = vmatprep.subr.bf16.mxu0 0
    %333 = vmatpush2.bf16.msra.mxu0 0
    %334 = vmatprep.subr.bf16.mxu0 0
    %335 = vmatpush2.bf16.msra.mxu0 0
    %336 = vmatprep.subr.bf16.mxu0 0
    %337 = vmatpush2.bf16.msra.mxu0 0
    %338 = vmatprep.mubr.bf16.mxu0 0
    %339 = vmatmul.mubr.bf16.gmra.mxu0 %v257
    %v340 = vpop.f32.mrf.mxu0
    %v341 = vadd.f32 0.0, %v340
    %v342 = vpop.f32.mrf.mxu0
    %v343 = vpop.f32.mrf.mxu0
    %v344 = vpop.f32.mrf.mxu0
    %345 = vdwg.mxu0
    %v346 = vmax.f32 %v341, 0.0
    %s347 = scalar_lea.vmem [#allocation2], 192
    %v348 = vld [vmem:[%s347] sm:$0xf]
    %v349 = vld [vmem:[%s347 + $0x4] sm:$0xf]
    %v350 = vld [vmem:[%s347 + $0x8] sm:$0xf]
    %v351 = vld [vmem:[%s347 + $0xc] sm:$0xf]
    %v352 = vld [vmem:[%s347 + $0x10] sm:$0xf]
    %v353 = vld [vmem:[%s347 + $0x14] sm:$0xf]
    %v354 = vld [vmem:[%s347 + $0x18] sm:$0xf]
    %v355 = vld [vmem:[%s347 + $0x1c] sm:$0xf]
    %v356 = vld [vmem:[%s347 + $0x20] sm:$0xf]
    %v357 = vld [vmem:[%s347 + $0x24] sm:$0xf]
    %v358 = vld [vmem:[%s347 + $0x28] sm:$0xf]
    %v359 = vld [vmem:[%s347 + $0x2c] sm:$0xf]
    %v360 = vld [vmem:[%s347 + $0x30] sm:$0xf]
    %v361 = vld [vmem:[%s347 + $0x34] sm:$0xf]
    %v362 = vld [vmem:[%s347 + $0x38] sm:$0xf]
    %v363 = vld [vmem:[%s347 + $0x3c] sm:$0xf]
    %v364 = vpack.c.bf16 %v346, %v346
    %v381 = vunpack.c.l.b16 %v348
    %v382 = vunpack.c.l.b16 %v349
    %v383 = vunpack.c.l.b16 %v350
    %v384 = vunpack.c.l.b16 %v351
    %v385 = vunpack.c.l.b16 %v352
    %v386 = vunpack.c.l.b16 %v353
    %v387 = vunpack.c.l.b16 %v354
    %v388 = vunpack.c.l.b16 %v355
    %v389 = vunpack.c.l.b16 %v356
    %v390 = vunpack.c.l.b16 %v357
    %v391 = vunpack.c.l.b16 %v358
    %v392 = vunpack.c.l.b16 %v359
    %v393 = vunpack.c.l.b16 %v360
    %v394 = vunpack.c.l.b16 %v361
    %v395 = vunpack.c.l.b16 %v362
    %v396 = vunpack.c.l.b16 %v363
    %v397 = vpack.c.b16 %v382, %v381
    %v398 = vpack.c.b16 %v384, %v383
    %v399 = vpack.c.b16 %v386, %v385
    %v400 = vpack.c.b16 %v388, %v387
    %v401 = vpack.c.b16 %v390, %v389
    %v402 = vpack.c.b16 %v392, %v391
    %v403 = vpack.c.b16 %v394, %v393
    %v404 = vpack.c.b16 %v396, %v395
    %413 = vmatprep.subr.bf16.mxu0 0
    %414 = vmatpush1.bf16.msra.mxu0 %v404
    %415 = vmatprep.subr.bf16.mxu0 0
    %416 = vmatpush1.bf16.msra.mxu0 %v403
    %417 = vmatprep.subr.bf16.mxu0 0
    %418 = vmatpush1.bf16.msra.mxu0 %v402
    %419 = vmatprep.subr.bf16.mxu0 0
    %420 = vmatpush1.bf16.msra.mxu0 %v401
    %421 = vmatprep.subr.bf16.mxu0 0
    %422 = vmatpush1.bf16.msra.mxu0 %v400
    %423 = vmatprep.subr.bf16.mxu0 0
    %424 = vmatpush1.bf16.msra.mxu0 %v399
    %425 = vmatprep.subr.bf16.mxu0 0
    %426 = vmatpush1.bf16.msra.mxu0 %v398
    %427 = vmatprep.subr.bf16.mxu0 0
    %428 = vmatpush1.bf16.msra.mxu0 %v397
    %429 = vmatprep.subr.bf16.mxu0 0
    %430 = vmatpush2.bf16.msra.mxu0 0
    %431 = vmatprep.subr.bf16.mxu0 0
    %432 = vmatpush2.bf16.msra.mxu0 0
    %433 = vmatprep.subr.bf16.mxu0 0
    %434 = vmatpush2.bf16.msra.mxu0 0
    %435 = vmatprep.subr.bf16.mxu0 0
    %436 = vmatpush2.bf16.msra.mxu0 0
    %437 = vmatprep.subr.bf16.mxu0 0
    %438 = vmatpush2.bf16.msra.mxu0 0
    %439 = vmatprep.subr.bf16.mxu0 0
    %440 = vmatpush2.bf16.msra.mxu0 0
    %441 = vmatprep.subr.bf16.mxu0 0
    %442 = vmatpush2.bf16.msra.mxu0 0
    %443 = vmatprep.subr.bf16.mxu0 0
    %444 = vmatpush2.bf16.msra.mxu0 0
    %445 = vmatprep.mubr.bf16.mxu0 0
    %446 = vmatmul.mubr.bf16.gmra.mxu0 %v364
    %v447 = vpop.f32.mrf.mxu0
    %v448 = vadd.f32 0.0, %v447
    %v449 = vpop.f32.mrf.mxu0
    %v450 = vpop.f32.mrf.mxu0
    %v451 = vpop.f32.mrf.mxu0
    %452 = vdwg.mxu0
    %453 = vst [vmem:[%s2] sm:$0xff] %v448
    // Predicated region
    $region14: #{dqn_forward.1} parent=1 // pred_check
      _
    $region15: #{dqn_forward.1} parent=1 // pred_check_branch
      %455 = sbr.rel (0) target = $region17
    $region16: #{dqn_forward.1} parent=1 // pred_region
      _
    $region17: #{dqn_forward.1} parent=1 // pred_fallthru
      _
    // Predicated region
    $region18: #{dqn_forward.1} parent=1 // pred_check
      _
    $region19: #{dqn_forward.1} parent=1 // pred_check_branch
      %457 = sbr.rel (0) target = $region21
    $region20: #{dqn_forward.1} parent=1 // pred_region
      _
    $region21: #{dqn_forward.1} parent=1 // pred_fallthru
      _
    %458 = vsyncpa [#allocation3], 1

</llo_original>
